<compile_context>
chip_gen: v7x
topology: tpu7x:2x2x1
jax: 0.10.0
libtpu: 0.0.40
codegen_flags: <defaults>
</compile_context>

<pallas_src>
import math

import jax
import jax.numpy as jnp
from jax.experimental import pallas as pl
from jax.experimental.pallas import tpu as pltpu

_LANES = 128


# ---------------------------------------------------------------------------
# Trace-time hardware introspection (defensive: falls back to conservative
# values on emulators / older runtimes).
# ---------------------------------------------------------------------------
def _vmem_capacity_bytes() -> int:
    try:
        return int(pltpu.get_tpu_info().vmem_capacity_bytes)
    except Exception:
        return 64 * 1024 * 1024          # conservative: v7x per-TC physical VMEM


def _num_tensorcores() -> int:
    for getter in (
        lambda: getattr(pltpu.get_tpu_info(), "num_cores"),
        lambda: getattr(jax.devices()[0], "num_cores"),
    ):
        try:
            n = int(getter())
            if n >= 1:
                return n
        except Exception:
            pass
    return 1                              # v5e / v6e: one TensorCore per chip


# ---------------------------------------------------------------------------
# pe table construction / preparation (hoisted out of the forward hot path)
# ---------------------------------------------------------------------------
def build_pe_table(d_model: int, max_len: int = 2000) -> jnp.ndarray:
    """Replicates the PyTorch __init__ buffer exactly (float32, (max_len, d_model))."""
    position = jnp.arange(0, max_len, dtype=jnp.float32)[:, None]            # (max_len, 1)
    div_term = jnp.exp(
        jnp.arange(0, d_model, 2, dtype=jnp.float32) * (-math.log(10000.0) / d_model))
    pe = jnp.zeros((max_len, d_model), dtype=jnp.float32)
    pe = pe.at[:, 0::2].set(jnp.sin(position * div_term))
    # Identical to the PyTorch module for even d_model (the reference module
    # errors out for odd d_model, so the slice below only guards that case).
    pe = pe.at[:, 1::2].set(jnp.cos(position * div_term)[:, : d_model // 2])
    return pe                                                                # (max_len, d_model)


def prepare_pe(pe_table: jnp.ndarray, seq_len: int, *, batch_size: int | None = None,
               dtype=jnp.float32) -> jnp.ndarray:
    """One-time (per seq_len) preparation, outside the forward hot path.

    Returns a (P, C) buffer whose flattened contents are an integer number of copies
    of pe[:seq_len].ravel(); C is a multiple of 128 whenever the shapes allow it so
    kernel loads/stores are lane-dense (unmasked full-width vst).

    dtype: keep float32 (bit-exact vs the PyTorch f32 buffer) or pre-cast to x's
    dtype (e.g. bf16 on v6e/v7x) to halve pe HBM/VMEM traffic (one extra rounding).
    """
    max_len, d_model = pe_table.shape
    if seq_len > max_len:
        raise ValueError(f"seq_len {seq_len} > max_len {max_len}")
    pe_s = pe_table[:seq_len].astype(dtype)                    # (S, D)
    if d_model % _LANES == 0:
        return pe_s                                            # already lane-dense
    flat = seq_len * d_model
    if flat % _LANES == 0:
        return pe_s.reshape(flat // _LANES, _LANES)            # fold rows into 128 lanes
    # D < 128 and S*D not a multiple of 128: replicate pe k times so k batch
    # elements fold into the row axis and the lane dim becomes exactly 128.
    k = _LANES // math.gcd(flat, _LANES)
    if batch_size is not None and batch_size % k == 0:
        return jnp.tile(pe_s.reshape(-1), (k,)).reshape(k * flat // _LANES, _LANES)
    # TODO(synk): last-resort path keeps D (<128) as the lane dim -> masked vst.msk
    # stores; pad d_model to a multiple of 128 upstream to avoid this penalty.
    return pe_s


# ---------------------------------------------------------------------------
# Tile selection
# ---------------------------------------------------------------------------
def _native_sublanes(itemsize: int) -> int:
    # Sub-32-bit dtypes pack along sublanes: f32 -> 8, bf16 -> 16, int8/fp8 -> 32.
    return 8 * max(1, 4 // max(1, itemsize))


def _row_tile_candidates(P: int, itemsize: int):
    sub = _native_sublanes(itemsize)
    cands = [pt for pt in range(sub, P, sub) if P % pt == 0]
    if not cands:                                  # fall back to the 8-sublane grid
        cands = [pt for pt in range(8, P, 8) if P % pt == 0]
    cands.append(P)                                # full extent is always layout-legal
    return sorted(set(cands))


def _choose_tiles(B, P, C, x_itemsize, pe_itemsize, budget_bytes, target_block_bytes,
                  min_steps):
    """Biggest (Bt, Pt, C) x/out block whose pipelined footprint (2*x + 2*out + 2*pe
    worst case) fits budget_bytes, capped at target_block_bytes per x buffer
    (diminishing returns past ~6-8 MiB), while keeping >= min_steps grid steps when
    the shape allows it (>= 2 steps/TensorCore on multi-TC parts, 1 on v5e/v6e)."""
    row_cands = _row_tile_candidates(P, x_itemsize)
    batch_cands = [b for b in range(1, B + 1) if B % b == 0]

    def footprint(pt, bt):
        return 4 * bt * pt * C * x_itemsize + 2 * pt * C * pe_itemsize

    feasible = [(pt, bt) for pt in row_cands for bt in batch_cands
                if footprint(pt, bt) <= budget_bytes]
    if not feasible:                               # pathological shape: smallest tile
        return min(row_cands), 1

    # Only require min_steps if some feasible tiling can actually reach it.
    max_steps = max((P // pt) * (B // bt) for pt, bt in feasible)
    need = min(min_steps, max_steps)
    feasible = [(pt, bt) for pt, bt in feasible if (P // pt) * (B // bt) >= need]

    under = [(pt, bt) for pt, bt in feasible
             if bt * pt * C * x_itemsize <= target_block_bytes]
    if under:
        # Biggest block under the target; prefer folding batch (fewer pe re-DMAs).
        return max(under, key=lambda t: (t[0] * t[1], t[1]))
    # Everything exceeds the target (e.g. huge C): smallest feasible block.
    return min(feasible, key=lambda t: t[0] * t[1])


# ---------------------------------------------------------------------------
# Kernel + wrapper
# ---------------------------------------------------------------------------
def _pe_add_kernel(x_ref, pe_ref, o_ref):
    # x_ref/o_ref: (Bt, Pt, C); pe_ref: (Pt, C), broadcast over the batch dim.
    x = x_ref[...]
    pe = pe_ref[...][None, :, :]
    if x.dtype == pe.dtype:
        o_ref[...] = (x + pe).astype(o_ref.dtype)            # native-dtype add (bf16 path)
    else:
        o_ref[...] = (x.astype(jnp.float32) + pe.astype(jnp.float32)).astype(o_ref.dtype)


def positional_encoding_forward(x: jnp.ndarray, pe_prepared: jnp.ndarray,
                                *, donate_x: bool = False) -> jnp.ndarray:
    """x: (B, S, D); pe_prepared: (P, C) from prepare_pe (P*C = fold * S*D)."""
    B, S, D = x.shape
    P, C = pe_prepared.shape
    if (P * C) % (S * D) != 0:
        raise ValueError("pe_prepared does not tile x's (seq_len, d_model)")
    fold = (P * C) // (S * D)          # batch elements folded into the row axis
    if B % fold != 0:
        raise ValueError(f"batch {B} not divisible by pe batch-fold factor {fold}")
    Bg = B // fold

    xv = x.reshape(Bg, P, C)           # contiguous reshape -> free view
    x_itemsize = x.dtype.itemsize
    pe_itemsize = pe_prepared.dtype.itemsize

    cap = _vmem_capacity_bytes()                           # physical per-core VMEM
    budget = cap // 2                                      # kernel-buffer budget
    target = (8 << 20) if cap >= (128 << 20) else (6 << 20)  # per x/out buffer
    cores = _num_tensorcores()
    min_steps = 2 * cores if cores > 1 else 1              # >= 2 steps/core, multi-TC only

    Pt, Bt = _choose_tiles(Bg, P, C, x_itemsize, pe_itemsize, budget, target, min_steps)
    n_p, n_b = P // Pt, Bg // Bt

    # Explicit VMEM limit sized from the real pipelined footprint so tiles larger
    # than the scoped default (16 MiB v5e / 32 MiB v6e,v7x) compile everywhere.
    foot = 4 * Bt * Pt * C * x_itemsize + 2 * Pt * C * pe_itemsize
    vmem_limit = int(min(cap - (4 << 20), max(16 << 20, foot + foot // 4 + (2 << 20))))

    def run(pe_pipeline_mode):
        pe_kwargs = {} if pe_pipeline_mode is None else dict(pipeline_mode=pe_pipeline_mode)
        return pl.pallas_call(
            _pe_add_kernel,
            out_shape=jax.ShapeDtypeStruct((Bg, P, C), x.dtype),
            grid_spec=pltpu.PrefetchScalarGridSpec(
                num_scalar_prefetch=0,
                grid=(n_p, n_b),                                        # batch innermost
                in_specs=[
                    pl.BlockSpec((Bt, Pt, C), lambda p, b: (b, p, 0)),  # x tile
                    # pe: block index constant across the inner (b) axis -> DMA'd once
                    # per row-block, stays resident; single-buffered (never prefetched).
                    pl.BlockSpec((Pt, C), lambda p, b: (p, 0), **pe_kwargs),
                ],
                out_specs=pl.BlockSpec((Bt, Pt, C), lambda p, b: (b, p, 0)),
            ),
            compiler_params=pltpu.CompilerParams(
                dimension_semantics=("parallel", "parallel"),           # megacore-shardable
                vmem_limit_bytes=vmem_limit,
            ),
            # When x is dead after this op (typical in the transformer forward),
            # alias it to the output to avoid a second (B, S, D) HBM allocation.
            input_output_aliases=({0: 0} if donate_x else {}),
        )(xv, pe_prepared)

    try:
        out = run(pl.Buffered(1))      # single-buffer the resident pe tile
    except Exception:
        # pipeline_mode / Buffered(1) unsupported on this jax version: fall back to
        # default double-buffering (pe's 2x footprint is already in the budget).
        out = run(None)

    return out.reshape(B, S, D)


if __name__ == "__main__":
    max_len = 2000
    key = jax.random.PRNGKey(0)

    # --- main check: (B, S, D) = (2, 8, 32), f32 (matches the PyTorch forward) ---
    B, S, D = 2, 8, 32
    x = jax.random.normal(key, (B, S, D), dtype=jnp.float32)

    pe_table = build_pe_table(D, max_len)                       # __init__-time buffer (f32)
    pe_prepared = prepare_pe(pe_table, S, batch_size=B)         # hoisted out of hot path

    out = positional_encoding_forward(x, pe_prepared)
    out = jax.block_until_ready(out)

    ref = x + pe_table[None, :S, :]
    assert out.shape == (B, S, D)
    assert out.dtype == x.dtype
    assert jnp.allclose(out, ref, atol=1e-6, rtol=1e-6)

    # --- secondary check: batch-fold path (D < 128, S*D not a multiple of 128) ---
    B2, S2, D2 = 4, 5, 32                                       # S*D = 160 -> fold k = 4
    x2 = jax.random.normal(jax.random.PRNGKey(1), (B2, S2, D2), dtype=jnp.float32)
    pe_table2 = build_pe_table(D2, max_len)
    pe_prepared2 = prepare_pe(pe_table2, S2, batch_size=B2)
    out2 = jax.block_until_ready(positional_encoding_forward(x2, pe_prepared2))
    ref2 = x2 + pe_table2[None, :S2, :]
    assert jnp.allclose(out2, ref2, atol=1e-6, rtol=1e-6)

    print("KERNEL_OK")
</pallas_src>

<mosaic_0001>
module attributes {stable_mosaic.version = 11 : i64} {
  func.func @_pe_add_kernel(%arg0: i32, %arg1: i32, %arg2: memref<2x2x128xf32, #tpu.memory_space<vmem>>, %arg3: memref<2x128xf32, #tpu.memory_space<vmem>>, %arg4: memref<2x2x128xf32, #tpu.memory_space<vmem>>) attributes {dimension_semantics = [#tpu.dimension_semantics<parallel>, #tpu.dimension_semantics<parallel>], iteration_bounds = array<i64: 1, 1>, scalar_prefetch = 0 : i64, scratch_operands = 0 : i64, tpu.core_type = #tpu.core_type<tc>, window_params = [{transform_indices = @transform_0, window_bounds = array<i64: 2, 2, 128>}, {pipeline_mode = #tpu.pipeline_mode<synchronous>, transform_indices = @transform_1, window_bounds = array<i64: 2, 128>}, {transform_indices = @transform_2, window_bounds = array<i64: 2, 2, 128>}]} {
    %c0 = arith.constant 0 : index
    %c0_0 = arith.constant 0 : index
    %c0_1 = arith.constant 0 : index
    %0 = vector.load %arg2[%c0, %c0_0, %c0_1] : memref<2x2x128xf32, #tpu.memory_space<vmem>>, vector<2x2x128xf32>
    %c0_2 = arith.constant 0 : index
    %c0_3 = arith.constant 0 : index
    %1 = vector.load %arg3[%c0_2, %c0_3] : memref<2x128xf32, #tpu.memory_space<vmem>>, vector<2x128xf32>
    %2 = vector.shape_cast %1 : vector<2x128xf32> to vector<1x2x128xf32>
    %3 = vector.broadcast %2 : vector<1x2x128xf32> to vector<2x2x128xf32>
    %4 = arith.addf %0, %3 : vector<2x2x128xf32>
    %c0_4 = arith.constant 0 : index
    %c0_5 = arith.constant 0 : index
    %c0_6 = arith.constant 0 : index
    %5 = vector.load %arg4[%c0_4, %c0_5, %c0_6] : memref<2x2x128xf32, #tpu.memory_space<vmem>>, vector<2x2x128xf32>
    tpu.vector_store %arg4[%c0_4, %c0_5, %c0_6], %4 {strides = array<i32>} : memref<2x2x128xf32, #tpu.memory_space<vmem>>, vector<2x2x128xf32>,
    return
  }
  func.func @transform_0(%arg0: i32, %arg1: i32) -> (i32, i32, i32) {
    %c0_i32 = arith.constant 0 : i32
    %c0_i32_0 = arith.constant 0 : i32
    return %arg1, %arg0, %c0_i32 : i32, i32, i32
  }
  func.func @transform_1(%arg0: i32, %arg1: i32) -> (i32, i32) {
    %c0_i32 = arith.constant 0 : i32
    %c0_i32_0 = arith.constant 0 : i32
    return %arg0, %c0_i32 : i32, i32
  }
  func.func @transform_2(%arg0: i32, %arg1: i32) -> (i32, i32, i32) {
    %c0_i32 = arith.constant 0 : i32
    %c0_i32_0 = arith.constant 0 : i32
    return %arg1, %arg0, %c0_i32 : i32, i32, i32
  }
}

module attributes {stable_mosaic.version = 11 : i64} {
  func.func @_pe_add_kernel(%arg0: i32, %arg1: i32, %arg2: memref<2x2x128xf32, #tpu.memory_space<vmem>>, %arg3: memref<2x128xf32, #tpu.memory_space<vmem>>, %arg4: memref<2x2x128xf32, #tpu.memory_space<vmem>>) attributes {dimension_semantics = [#tpu.dimension_semantics<parallel>, #tpu.dimension_semantics<parallel>], iteration_bounds = array<i64: 1, 1>, scalar_prefetch = 0 : i64, scratch_operands = 0 : i64, tpu.core_type = #tpu.core_type<tc>, window_params = [{transform_indices = @transform_0, window_bounds = array<i64: 2, 2, 128>}, {transform_indices = @transform_1, window_bounds = array<i64: 2, 128>}, {transform_indices = @transform_2, window_bounds = array<i64: 2, 2, 128>}]} {
    %c0 = arith.constant 0 : index
    %c0_0 = arith.constant 0 : index
    %c0_1 = arith.constant 0 : index
    %0 = vector.load %arg2[%c0, %c0_0, %c0_1] : memref<2x2x128xf32, #tpu.memory_space<vmem>>, vector<2x2x128xf32>
    %c0_2 = arith.constant 0 : index
    %c0_3 = arith.constant 0 : index
    %1 = vector.load %arg3[%c0_2, %c0_3] : memref<2x128xf32, #tpu.memory_space<vmem>>, vector<2x128xf32>
    %2 = vector.shape_cast %1 : vector<2x128xf32> to vector<1x2x128xf32>
    %3 = vector.broadcast %2 : vector<1x2x128xf32> to vector<2x2x128xf32>
    %4 = arith.addf %0, %3 : vector<2x2x128xf32>
    %c0_4 = arith.constant 0 : index
    %c0_5 = arith.constant 0 : index
    %c0_6 = arith.constant 0 : index
    %5 = vector.load %arg4[%c0_4, %c0_5, %c0_6] : memref<2x2x128xf32, #tpu.memory_space<vmem>>, vector<2x2x128xf32>
    tpu.vector_store %arg4[%c0_4, %c0_5, %c0_6], %4 {strides = array<i32>} : memref<2x2x128xf32, #tpu.memory_space<vmem>>, vector<2x2x128xf32>,
    return
  }
  func.func @transform_0(%arg0: i32, %arg1: i32) -> (i32, i32, i32) {
    %c0_i32 = arith.constant 0 : i32
    %c0_i32_0 = arith.constant 0 : i32
    return %arg1, %arg0, %c0_i32 : i32, i32, i32
  }
  func.func @transform_1(%arg0: i32, %arg1: i32) -> (i32, i32) {
    %c0_i32 = arith.constant 0 : i32
    %c0_i32_0 = arith.constant 0 : i32
    return %arg0, %c0_i32 : i32, i32
  }
  func.func @transform_2(%arg0: i32, %arg1: i32) -> (i32, i32, i32) {
    %c0_i32 = arith.constant 0 : i32
    %c0_i32_0 = arith.constant 0 : i32
    return %arg1, %arg0, %c0_i32 : i32, i32, i32
  }
}

</mosaic_0001>

<llo_original>
// kernel: tpu_custom_call.1
$region0: #{tpu_custom_call.1}
  #allocation0 [shape = 'u32[]', space=smem, size = 0x4, offset = 0x4, fixed_abs, tag = 'smem constant byte address 0x4 - core index']
  #allocation1 [shape = 'u32[144,128]{1,0:T(1,128)}', space=vmem, size = 0x12000, scoped, tag = 'internal scratch']
  %s0 = inlined_call_operand.hbm [shape: f32[2,2,128], index: 0, kind: input, shape index: {}]
  %s1 = inlined_call_operand.vmem [shape: f32[2,128], index: 1, kind: input, shape index: {}]
  %s2 = inlined_call_operand.hbm [shape: f32[2,2,128], index: 2, kind: output, shape index: {}]
  %s3 = sld [smem:[#allocation0]]
  $region22: #{tpu_custom_call.1} parent=0
    _
  %s5 = ssub.s32 1, %s3
  %s6 = scalar_select 0, %s5, %s3
  $region1: #{tpu_custom_call.1} parent=0
    #allocation2 [shape = 'u8[2048]{0}', space=vmem, size = 0x800, scoped, tag = 'input window, operand 0, single buffered']
    #allocation3 [shape = 's32[1]{0}', space=sflag, size = 0x4, scoped, tag = 'scoped memory for tpu_custom_call.1']
    #allocation4 [shape = 's32[1]{0}', space=sflag, size = 0x4, scoped, tag = 'scoped memory for tpu_custom_call.1']
    #allocation5 [shape = 'u8[2048]{0}', space=vmem, size = 0x800, scoped, tag = 'output window, operand 0, single buffered']
    %7 = vsyncpa [#allocation3], 0
    %8 = vsyncpa [#allocation4], 0
    // Predicated region
    $region2: #{tpu_custom_call.1} parent=1 // pred_check
      _
    $region3: #{tpu_custom_call.1} parent=1 // pred_check_branch
      %10 = sbr.rel (0) target = $region5
    $region4: #{tpu_custom_call.1} parent=1 // pred_region
      %s12 = ssub.s32 64, 64
      %13 = vsyncadd [#allocation3], %s12
      %s14 = sshll.u32 [#allocation2], 4
      %s15 = int_to_ptr.vmem [resolvable:$true] %s14
      %20 = dma.hbm_to_vmem [thread:$0]  %s0, 64, %s15, [#allocation3], 32, 32, 2
    $region5: #{tpu_custom_call.1} parent=1 // pred_fallthru
      _
    // Predicated region
    $region6: #{tpu_custom_call.1} parent=1 // pred_check
      _
    $region7: #{tpu_custom_call.1} parent=1 // pred_check_branch
      %22 = sbr.rel (0) target = $region9
    $region8: #{tpu_custom_call.1} parent=1 // pred_region
      _
    $region9: #{tpu_custom_call.1} parent=1 // pred_fallthru
      _
    // Predicated region
    $region10: #{tpu_custom_call.1} parent=1 // pred_check
      _
    $region11: #{tpu_custom_call.1} parent=1 // pred_check_branch
      %24 = sbr.rel (0) target = $region13
    $region12: #{tpu_custom_call.1} parent=1 // pred_region
      %25 = dma.done [#allocation3], 64
    $region13: #{tpu_custom_call.1} parent=1 // pred_fallthru
      _
    %v26 = vld [vmem:[#allocation2] sm:$0x3]
    %v27 = vld [vmem:[#allocation2 + $0x2] sm:$0x3]
    %v28 = vld [vmem:[%s1] sm:$0x3]
    %v29 = vadd.f32 %v26, %v28
    %v30 = vadd.f32 %v27, %v28
    %31 = vst [vmem:[#allocation5] sm:$0x3] %v29
    %32 = vst [vmem:[#allocation5 + $0x2] sm:$0x3] %v30
    // Predicated region
    $region14: #{tpu_custom_call.1} parent=1 // pred_check
      _
    $region15: #{tpu_custom_call.1} parent=1 // pred_check_branch
      %34 = sbr.rel (0) target = $region17
    $region16: #{tpu_custom_call.1} parent=1 // pred_region
      %s36 = ssub.s32 64, 64
      %37 = vsyncadd [#allocation4], %s36
      %s38 = sshll.u32 [#allocation5], 4
      %s39 = int_to_ptr.vmem [resolvable:$true] %s38
      %44 = dma.vmem_to_hbm [thread:$0]  %s39, 64, %s2, [#allocation4], 32, 32, 2
    $region17: #{tpu_custom_call.1} parent=1 // pred_fallthru
      _
    // Predicated region
    $region18: #{tpu_custom_call.1} parent=1 // pred_check
      _
    $region19: #{tpu_custom_call.1} parent=1 // pred_check_branch
      %46 = sbr.rel (0) target = $region21
    $region20: #{tpu_custom_call.1} parent=1 // pred_region
      %47 = dma.done [#allocation4], 64
    $region21: #{tpu_custom_call.1} parent=1 // pred_fallthru
      _
    %48 = vsyncpa [#allocation3], 1
    %49 = vsyncpa [#allocation4], 1

// kernel: tpu_custom_call.1
$region0: #{tpu_custom_call.1}
  #allocation0 [shape = 'u32[]', space=smem, size = 0x4, offset = 0x4, fixed_abs, tag = 'smem constant byte address 0x4 - core index']
  #allocation1 [shape = 'u32[144,128]{1,0:T(1,128)}', space=vmem, size = 0x12000, scoped, tag = 'internal scratch']
  %s0 = inlined_call_operand.hbm [shape: f32[2,2,128], index: 0, kind: input, shape index: {}]
  %s1 = inlined_call_operand.vmem [shape: f32[2,128], index: 1, kind: input, shape index: {}]
  %s2 = inlined_call_operand.hbm [shape: f32[2,2,128], index: 2, kind: output, shape index: {}]
  %s3 = sld [smem:[#allocation0]]
  $region22: #{tpu_custom_call.1} parent=0
    _
  %s5 = ssub.s32 1, %s3
  %s6 = scalar_select 0, %s5, %s3
  $region1: #{tpu_custom_call.1} parent=0
    #allocation2 [shape = 'u8[2048]{0}', space=vmem, size = 0x800, scoped, tag = 'input window, operand 0, single buffered']
    #allocation3 [shape = 's32[1]{0}', space=sflag, size = 0x4, scoped, tag = 'scoped memory for tpu_custom_call.1']
    #allocation4 [shape = 's32[1]{0}', space=sflag, size = 0x4, scoped, tag = 'scoped memory for tpu_custom_call.1']
    #allocation5 [shape = 'u8[2048]{0}', space=vmem, size = 0x800, scoped, tag = 'output window, operand 0, single buffered']
    %7 = vsyncpa [#allocation3], 0
    %8 = vsyncpa [#allocation4], 0
    // Predicated region
    $region2: #{tpu_custom_call.1} parent=1 // pred_check
      _
    $region3: #{tpu_custom_call.1} parent=1 // pred_check_branch
      %10 = sbr.rel (0) target = $region5
    $region4: #{tpu_custom_call.1} parent=1 // pred_region
      %s12 = ssub.s32 64, 64
      %13 = vsyncadd [#allocation3], %s12
      %s14 = sshll.u32 [#allocation2], 4
      %s15 = int_to_ptr.vmem [resolvable:$true] %s14
      %20 = dma.hbm_to_vmem [thread:$0]  %s0, 64, %s15, [#allocation3], 32, 32, 2
    $region5: #{tpu_custom_call.1} parent=1 // pred_fallthru
      _
    // Predicated region
    $region6: #{tpu_custom_call.1} parent=1 // pred_check
      _
    $region7: #{tpu_custom_call.1} parent=1 // pred_check_branch
      %22 = sbr.rel (0) target = $region9
    $region8: #{tpu_custom_call.1} parent=1 // pred_region
      _
    $region9: #{tpu_custom_call.1} parent=1 // pred_fallthru
      _
    // Predicated region
    $region10: #{tpu_custom_call.1} parent=1 // pred_check
      _
    $region11: #{tpu_custom_call.1} parent=1 // pred_check_branch
      %24 = sbr.rel (0) target = $region13
    $region12: #{tpu_custom_call.1} parent=1 // pred_region
      %25 = dma.done [#allocation3], 64
    $region13: #{tpu_custom_call.1} parent=1 // pred_fallthru
      _
    %v26 = vld [vmem:[#allocation2] sm:$0x3]
    %v27 = vld [vmem:[#allocation2 + $0x2] sm:$0x3]
    %v28 = vld [vmem:[%s1] sm:$0x3]
    %v29 = vadd.f32 %v26, %v28
    %v30 = vadd.f32 %v27, %v28
    %31 = vst [vmem:[#allocation5] sm:$0x3] %v29
    %32 = vst [vmem:[#allocation5 + $0x2] sm:$0x3] %v30
    // Predicated region
    $region14: #{tpu_custom_call.1} parent=1 // pred_check
      _
    $region15: #{tpu_custom_call.1} parent=1 // pred_check_branch
      %34 = sbr.rel (0) target = $region17
    $region16: #{tpu_custom_call.1} parent=1 // pred_region
      %s36 = ssub.s32 64, 64
      %37 = vsyncadd [#allocation4], %s36
      %s38 = sshll.u32 [#allocation5], 4
      %s39 = int_to_ptr.vmem [resolvable:$true] %s38
      %44 = dma.vmem_to_hbm [thread:$0]  %s39, 64, %s2, [#allocation4], 32, 32, 2
    $region17: #{tpu_custom_call.1} parent=1 // pred_fallthru
      _
    // Predicated region
    $region18: #{tpu_custom_call.1} parent=1 // pred_check
      _
    $region19: #{tpu_custom_call.1} parent=1 // pred_check_branch
      %46 = sbr.rel (0) target = $region21
    $region20: #{tpu_custom_call.1} parent=1 // pred_region
      %47 = dma.done [#allocation4], 64
    $region21: #{tpu_custom_call.1} parent=1 // pred_fallthru
      _
    %48 = vsyncpa [#allocation3], 1
    %49 = vsyncpa [#allocation4], 1

</llo_original>
